<compile_context>
chip_gen: v7x
topology: tpu7x:2x2x1
jax: 0.10.0
libtpu: 0.0.40
codegen_flags: <defaults>
</compile_context>

<pallas_src>
import functools

import jax
import jax.numpy as jnp
from jax.experimental import pallas as pl
from jax.experimental.pallas import tpu as pltpu


def _focal_l1_kernel(x_ref, t_ref, o_ref, *, beta, gamma, activate):
    x = x_ref[...]
    t = t_ref[...]
    abs_diff = jnp.abs((x - t).astype(jnp.float32))   # F.l1_loss(reduction='none')
    if activate == "tanh":
        focal = jnp.tanh(beta * abs_diff)
    else:  # 'sigmoid' (default): 2*sigmoid(b*x) - 1 == tanh(0.5*b*x), one EUP op
        focal = jnp.tanh((0.5 * beta) * abs_diff)

    if gamma == 0:                                     # focal ** 0 == 1
        out = abs_diff
    elif isinstance(gamma, int) and 1 <= gamma <= 4:   # repeated VPU muls, no pow
        w = focal
        for _ in range(gamma - 1):
            w = w * focal
        out = abs_diff * w
    else:
        out = abs_diff * focal ** gamma
    o_ref[...] = out.astype(o_ref.dtype)


def _round_up(x, m):
    return -(-x // m) * m


def focal_l1_loss(inputs, targets, *, beta=0.2, gamma=1, activate="sigmoid"):
    assert inputs.shape == targets.shape and inputs.dtype == targets.dtype
    orig_shape = inputs.shape
    dtype = inputs.dtype
    total = int(inputs.size)

    # ---- layout: free reshape to a wide lane-dense slab when possible ------
    lanes = next((c for c in (1024, 512, 256, 128) if total % c == 0), None)
    padded = lanes is None
    if padded:
        # Rare slow path (total not a multiple of 128): pad the flat vector
        # once to the next multiple of 128; pad elements produce 0 and are
        # sliced away below.
        lanes = 128
        pad = _round_up(total, lanes) - total
        x2 = jnp.pad(inputs.reshape(-1), (0, pad)).reshape(-1, lanes)
        t2 = jnp.pad(targets.reshape(-1), (0, pad)).reshape(-1, lanes)
    else:
        x2 = inputs.reshape(-1, lanes)    # row-major reshape: no data movement
        t2 = targets.reshape(-1, lanes)
    rows = x2.shape[0]

    # ---- tiling: ~2 MiB per block buffer, grid >= 2 when it matters --------
    itemsize = jnp.dtype(dtype).itemsize
    sub = 8 * max(1, 4 // itemsize)       # sublane tile: 8 (f32), 16 (bf16), 32 (i8)
    target_rows = max(sub, ((2 * 1024 * 1024) // (lanes * itemsize)) // sub * sub)
    if rows <= sub:
        tile_rows = rows                  # single block; block dim == full dim
    elif rows <= target_rows:
        # small input: split into ~2 blocks so v7x's two TensorCores both work
        tile_rows = max(sub, _round_up(pl.cdiv(rows, 2), sub))
    else:
        tile_rows = target_rows
    grid = pl.cdiv(rows, tile_rows)       # Pallas masks the partial last block

    kernel = functools.partial(
        _focal_l1_kernel, beta=float(beta), gamma=gamma, activate=activate
    )

    out2 = pl.pallas_call(
        kernel,
        out_shape=jax.ShapeDtypeStruct((rows, lanes), dtype),
        grid_spec=pltpu.PrefetchScalarGridSpec(
            num_scalar_prefetch=0,
            grid=(grid,),
            in_specs=[
                pl.BlockSpec((tile_rows, lanes), lambda i: (i, 0)),
                pl.BlockSpec((tile_rows, lanes), lambda i: (i, 0)),
            ],
            out_specs=pl.BlockSpec((tile_rows, lanes), lambda i: (i, 0)),
        ),
        compiler_params=pltpu.CompilerParams(
            dimension_semantics=("parallel",),
            # 3 arrays x 2 pipeline buffers x <=2 MiB ~= 12 MiB: raise past
            # v5e's 16 MiB default scoped limit, still well inside v7x's
            # 64 MiB physical VMEM.
            vmem_limit_bytes=32 * 1024 * 1024,
        ),
    )(x2, t2)

    if padded:
        return out2.reshape(-1)[:total].reshape(orig_shape)
    return out2.reshape(orig_shape)       # free reshape back to NCHW


def _reference(inputs, targets, *, beta=0.2, gamma=1, activate="sigmoid"):
    abs_diff = jnp.abs(inputs - targets)
    if activate == "tanh":
        focal = jnp.tanh(beta * abs_diff)
    else:
        focal = 2.0 * jax.nn.sigmoid(beta * abs_diff) - 1.0
    return abs_diff * focal ** gamma


if __name__ == "__main__":
    key = jax.random.PRNGKey(0)
    k1, k2 = jax.random.split(key)
    # Small NCHW-like shape consistent with a regression loss over feature maps.
    shape = (2, 4, 16, 16)
    inputs = jax.random.normal(k1, shape, dtype=jnp.float32) * 10.0
    targets = jax.random.normal(k2, shape, dtype=jnp.float32) * 10.0

    out = focal_l1_loss(inputs, targets, beta=0.2, gamma=1, activate="sigmoid")
    out = jax.block_until_ready(out)

    ref = _reference(inputs, targets, beta=0.2, gamma=1, activate="sigmoid")
    assert out.shape == inputs.shape and out.dtype == inputs.dtype
    # tanh(0.5*b*x) == 2*sigmoid(b*x)-1 exactly in math; fp diff << 1e-5.
    assert jnp.allclose(out, ref, atol=1e-5, rtol=1e-5), "mismatch vs reference"
    print("KERNEL_OK")
</pallas_src>

<mosaic_0001>
module attributes {stable_mosaic.version = 11 : i64} {
  func.func @_focal_l1_kernel(%arg0: i32, %arg1: memref<2x1024xf32, #tpu.memory_space<vmem>>, %arg2: memref<2x1024xf32, #tpu.memory_space<vmem>>, %arg3: memref<2x1024xf32, #tpu.memory_space<vmem>>) attributes {dimension_semantics = [#tpu.dimension_semantics<parallel>], iteration_bounds = array<i64: 1>, scalar_prefetch = 0 : i64, scratch_operands = 0 : i64, tpu.core_type = #tpu.core_type<tc>, window_params = [{transform_indices = @transform_0, window_bounds = array<i64: 2, 1024>}, {transform_indices = @transform_1, window_bounds = array<i64: 2, 1024>}, {transform_indices = @transform_2, window_bounds = array<i64: 2, 1024>}]} {
    %c0 = arith.constant 0 : index
    %c0_0 = arith.constant 0 : index
    %0 = vector.load %arg1[%c0, %c0_0] : memref<2x1024xf32, #tpu.memory_space<vmem>>, vector<2x1024xf32>
    %c0_1 = arith.constant 0 : index
    %c0_2 = arith.constant 0 : index
    %1 = vector.load %arg2[%c0_1, %c0_2] : memref<2x1024xf32, #tpu.memory_space<vmem>>, vector<2x1024xf32>
    %2 = arith.subf %0, %1 : vector<2x1024xf32>
    %3 = math.absf %2 : vector<2x1024xf32>
    %cst = arith.constant 1.000000e-01 : f32
    %4 = vector.broadcast %cst : f32 to vector<2x1024xf32>
    %5 = arith.mulf %4, %3 : vector<2x1024xf32>
    %6 = math.tanh %5 : vector<2x1024xf32>
    %7 = arith.mulf %3, %6 : vector<2x1024xf32>
    %c0_3 = arith.constant 0 : index
    %c0_4 = arith.constant 0 : index
    %8 = vector.load %arg3[%c0_3, %c0_4] : memref<2x1024xf32, #tpu.memory_space<vmem>>, vector<2x1024xf32>
    tpu.vector_store %arg3[%c0_3, %c0_4], %7 {strides = array<i32>} : memref<2x1024xf32, #tpu.memory_space<vmem>>, vector<2x1024xf32>,
    return
  }
  func.func @transform_0(%arg0: i32) -> (i32, i32) {
    %c0_i32 = arith.constant 0 : i32
    %c0_i32_0 = arith.constant 0 : i32
    return %arg0, %c0_i32 : i32, i32
  }
  func.func @transform_1(%arg0: i32) -> (i32, i32) {
    %c0_i32 = arith.constant 0 : i32
    %c0_i32_0 = arith.constant 0 : i32
    return %arg0, %c0_i32 : i32, i32
  }
  func.func @transform_2(%arg0: i32) -> (i32, i32) {
    %c0_i32 = arith.constant 0 : i32
    %c0_i32_0 = arith.constant 0 : i32
    return %arg0, %c0_i32 : i32, i32
  }
}

</mosaic_0001>

<llo_original>
// kernel: tpu_custom_call.1
$region0: #{tpu_custom_call.1}
  #allocation0 [shape = 'u32[]', space=smem, size = 0x4, offset = 0x4, fixed_abs, tag = 'smem constant byte address 0x4 - core index']
  #allocation1 [shape = 'u32[144,128]{1,0:T(1,128)}', space=vmem, size = 0x12000, scoped, tag = 'internal scratch']
  %s0 = inlined_call_operand.hbm [shape: f32[2,1024], index: 0, kind: input, shape index: {}]
  %s1 = inlined_call_operand.hbm [shape: f32[2,1024], index: 1, kind: input, shape index: {}]
  %s2 = inlined_call_operand.hbm [shape: f32[2,1024], index: 2, kind: output, shape index: {}]
  %s3 = sld [smem:[#allocation0]]
  $region26: #{tpu_custom_call.1} parent=0
    _
  %s5 = ssub.s32 1, %s3
  %s6 = scalar_select 0, %s5, %s3
  $region1: #{tpu_custom_call.1} parent=0
    #allocation2 [shape = 'u8[8192]{0}', space=vmem, size = 0x2000, scoped, tag = 'input window, operand 0, single buffered']
    #allocation3 [shape = 's32[1]{0}', space=sflag, size = 0x4, scoped, tag = 'scoped memory for tpu_custom_call.1']
    #allocation4 [shape = 's32[1]{0}', space=sflag, size = 0x4, scoped, tag = 'scoped memory for tpu_custom_call.1']
    #allocation5 [shape = 'u8[8192]{0}', space=vmem, size = 0x2000, scoped, tag = 'input window, operand 1, single buffered']
    #allocation6 [shape = 's32[1]{0}', space=sflag, size = 0x4, scoped, tag = 'scoped memory for tpu_custom_call.1']
    #allocation7 [shape = 'u8[8192]{0}', space=vmem, size = 0x2000, scoped, tag = 'output window, operand 0, single buffered']
    %7 = vsyncpa [#allocation3], 0
    %8 = vsyncpa [#allocation6], 0
    %9 = vsyncpa [#allocation4], 0
    // Predicated region
    $region2: #{tpu_custom_call.1} parent=1 // pred_check
      _
    $region3: #{tpu_custom_call.1} parent=1 // pred_check_branch
      %11 = sbr.rel (0) target = $region5
    $region4: #{tpu_custom_call.1} parent=1 // pred_region
      %s13 = ssub.s32 256, 256
      %14 = vsyncadd [#allocation3], %s13
      %s16 = sshll.u32 [#allocation2], 4
      %s17 = int_to_ptr.vmem [resolvable:$true] %s16
      %19 = dma.hbm_to_vmem [thread:$0]  %s0, 256, %s17, [#allocation3]
    $region5: #{tpu_custom_call.1} parent=1 // pred_fallthru
      _
    // Predicated region
    $region6: #{tpu_custom_call.1} parent=1 // pred_check
      _
    $region7: #{tpu_custom_call.1} parent=1 // pred_check_branch
      %21 = sbr.rel (0) target = $region9
    $region8: #{tpu_custom_call.1} parent=1 // pred_region
      %s23 = ssub.s32 256, 256
      %24 = vsyncadd [#allocation6], %s23
      %s26 = sshll.u32 [#allocation5], 4
      %s27 = int_to_ptr.vmem [resolvable:$true] %s26
      %29 = dma.hbm_to_vmem [thread:$0]  %s1, 256, %s27, [#allocation6]
    $region9: #{tpu_custom_call.1} parent=1 // pred_fallthru
      _
    // Predicated region
    $region10: #{tpu_custom_call.1} parent=1 // pred_check
      _
    $region11: #{tpu_custom_call.1} parent=1 // pred_check_branch
      %31 = sbr.rel (0) target = $region13
    $region12: #{tpu_custom_call.1} parent=1 // pred_region
      %32 = dma.done [#allocation3], 256
    $region13: #{tpu_custom_call.1} parent=1 // pred_fallthru
      _
    // Predicated region
    $region14: #{tpu_custom_call.1} parent=1 // pred_check
      _
    $region15: #{tpu_custom_call.1} parent=1 // pred_check_branch
      %34 = sbr.rel (0) target = $region17
    $region16: #{tpu_custom_call.1} parent=1 // pred_region
      %35 = dma.done [#allocation6], 256
    $region17: #{tpu_custom_call.1} parent=1 // pred_fallthru
      _
    %v36 = vld [vmem:[#allocation2] sm:$0xff]
    %v37 = vld [vmem:[#allocation2 + $0x8] sm:$0xff]
    %v38 = vld [vmem:[#allocation5] sm:$0xff]
    %v39 = vld [vmem:[#allocation5 + $0x8] sm:$0xff]
    %v40 = vsub.f32 %v36, %v38
    %v41 = vsub.f32 %v37, %v39
    %v42 = vand.u32 2147483647, %v40
    %v43 = vand.u32 2147483647, %v41
    %v44 = vmul.f32 %v42, 0.1
    %v45 = vmul.f32 %v43, 0.1
    %v46 = vtanh.pop %v44
    %v47 = vtanh.pop %v45
    %v48 = vmul.f32 %v42, %v46
    %v49 = vmul.f32 %v43, %v47
    %50 = vst [vmem:[#allocation7] sm:$0xff] %v48
    %51 = vst [vmem:[#allocation7 + $0x8] sm:$0xff] %v49
    // Predicated region
    $region18: #{tpu_custom_call.1} parent=1 // pred_check
      _
    $region19: #{tpu_custom_call.1} parent=1 // pred_check_branch
      %53 = sbr.rel (0) target = $region21
    $region20: #{tpu_custom_call.1} parent=1 // pred_region
      %s55 = ssub.s32 256, 256
      %56 = vsyncadd [#allocation4], %s55
      %s58 = sshll.u32 [#allocation7], 4
      %s59 = int_to_ptr.vmem [resolvable:$true] %s58
      %61 = dma.vmem_to_hbm [thread:$0]  %s59, 256, %s2, [#allocation4]
    $region21: #{tpu_custom_call.1} parent=1 // pred_fallthru
      _
    // Predicated region
    $region22: #{tpu_custom_call.1} parent=1 // pred_check
      _
    $region23: #{tpu_custom_call.1} parent=1 // pred_check_branch
      %63 = sbr.rel (0) target = $region25
    $region24: #{tpu_custom_call.1} parent=1 // pred_region
      %64 = dma.done [#allocation4], 256
    $region25: #{tpu_custom_call.1} parent=1 // pred_fallthru
      _
    %65 = vsyncpa [#allocation3], 1
    %66 = vsyncpa [#allocation6], 1
    %67 = vsyncpa [#allocation4], 1

</llo_original>
